<compile_context>
chip_gen: v7x
topology: tpu7x:2x2x1
jax: 0.10.0
libtpu: 0.0.40
codegen_flags: <defaults>
</compile_context>

<pallas_src>
import jax
import jax.numpy as jnp
from jax import lax
from jax.experimental import pallas as pl
from jax.experimental.pallas import tpu as pltpu


def _round_up(a, b):
    return (a + b - 1) // b * b


def patch_embed_kernel(x_ref, w_ref, b_ref, o_ref):
    # x_ref: (TM, K)   im2col patch rows
    # w_ref: (K, TC)   BN-folded projection weights
    # b_ref: (1, TC)   BN-folded bias
    # o_ref: (TM, TC)  output tile (embed_dim lane-dense)
    acc = jnp.dot(x_ref[...], w_ref[...], preferred_element_type=jnp.float32)
    o_ref[...] = (acc + b_ref[...]).astype(o_ref.dtype)


def patch_embed_forward(x, proj_w, proj_b, bn_g, bn_b, bn_mean, bn_var,
                        patch_size, eps=1e-5):
    """x: (N, Cin, H, W) -> (N, Cout, H//p, W//p)."""
    N, Cin, H, W = x.shape
    Cout = proj_w.shape[0]
    p = patch_size
    Hp, Wp = H // p, W // p
    M = N * Hp * Wp
    K = Cin * p * p

    # Non-overlapping patch extraction == single layout pass (no zero-padding
    # required because stride == kernel size).
    xp = x.reshape(N, Cin, Hp, p, Wp, p)
    xp = jnp.transpose(xp, (0, 2, 4, 1, 3, 5))        # (N, Hp, Wp, Cin, p, p)
    patches = xp.reshape(M, K)

    # Fold inference-mode BatchNorm (and the conv bias) into the projection:
    # mathematically identical, removes all BN work from the kernel.
    # TODO(synk): training-mode BatchNorm2d (batch statistics + running-stat
    # update) is not fused; only eval-mode BN is implemented here.
    scale = bn_g / jnp.sqrt(bn_var + eps)                    # (Cout,)
    w2d = proj_w.reshape(Cout, K) * scale[:, None]           # (Cout, K)
    bias = (proj_b - bn_mean) * scale + bn_b                 # (Cout,)
    wk = jnp.transpose(w2d, (1, 0))                          # (K, Cout)
    bk = bias.reshape(1, Cout)

    # Tile sizes: embed_dim on lanes (lane-dense stores), M on sublanes.
    TC = Cout if Cout <= 512 else 256
    TM = min(256, _round_up(M, 8))
    Mp = _round_up(M, TM)
    Cp = _round_up(Cout, TC)
    if Mp != M:
        patches = jnp.pad(patches, ((0, Mp - M), (0, 0)))
    if Cp != Cout:
        wk = jnp.pad(wk, ((0, 0), (0, Cp - Cout)))
        bk = jnp.pad(bk, ((0, 0), (0, Cp - Cout)))

    out2d = pl.pallas_call(
        patch_embed_kernel,
        out_shape=jax.ShapeDtypeStruct((Mp, Cp), x.dtype),
        grid_spec=pltpu.PrefetchScalarGridSpec(
            num_scalar_prefetch=0,
            grid=(Mp // TM, Cp // TC),
            in_specs=[
                pl.BlockSpec((TM, K), lambda i, j: (i, 0)),
                pl.BlockSpec((K, TC), lambda i, j: (0, j)),
                pl.BlockSpec((1, TC), lambda i, j: (0, j)),
            ],
            out_specs=pl.BlockSpec((TM, TC), lambda i, j: (i, j)),
        ),
        compiler_params=pltpu.CompilerParams(
            dimension_semantics=("parallel", "parallel")),
    )(patches, wk, bk)

    out = out2d[:M, :Cout].reshape(N, Hp, Wp, Cout)
    return jnp.transpose(out, (0, 3, 1, 2))                  # -> NCHW


def reference_forward(x, proj_w, proj_b, bn_g, bn_b, bn_mean, bn_var,
                      patch_size, eps=1e-5):
    """Pure-JAX reference matching PyTorch Conv2d + BatchNorm2d(eval)."""
    p = patch_size
    y = lax.conv_general_dilated(
        x, proj_w, window_strides=(p, p), padding="VALID",
        dimension_numbers=("NCHW", "OIHW", "NCHW"))
    y = y + proj_b[None, :, None, None]
    inv = (bn_g / jnp.sqrt(bn_var + eps))[None, :, None, None]
    return (y - bn_mean[None, :, None, None]) * inv + bn_b[None, :, None, None]


if __name__ == "__main__":
    key = jax.random.PRNGKey(0)
    # Small PatchEmbed: 32x32 image, 8x8 patches, 3 -> 128 channels.
    N, Cin, H, W = 2, 3, 32, 32
    patch, Cout = 8, 128

    ks = jax.random.split(key, 7)
    x = jax.random.normal(ks[0], (N, Cin, H, W), dtype=jnp.float32)
    proj_w = jax.random.normal(ks[1], (Cout, Cin, patch, patch),
                               dtype=jnp.float32) * 0.05
    proj_b = jax.random.normal(ks[2], (Cout,), dtype=jnp.float32) * 0.05
    bn_g = 1.0 + 0.1 * jax.random.normal(ks[3], (Cout,), dtype=jnp.float32)
    bn_b = 0.1 * jax.random.normal(ks[4], (Cout,), dtype=jnp.float32)
    bn_mean = 0.1 * jax.random.normal(ks[5], (Cout,), dtype=jnp.float32)
    bn_var = jnp.abs(jax.random.normal(ks[6], (Cout,), dtype=jnp.float32)) + 0.5

    out = patch_embed_forward(x, proj_w, proj_b, bn_g, bn_b, bn_mean, bn_var,
                              patch)
    out = jax.block_until_ready(out)

    ref = reference_forward(x, proj_w, proj_b, bn_g, bn_b, bn_mean, bn_var,
                            patch)
    assert out.shape == (N, Cout, H // patch, W // patch)
    # Tolerance accounts for TPU default f32 matmul/conv precision (bf16-pass
    # rounding differs between the Pallas dot and the XLA conv reference).
    assert jnp.allclose(out, ref, atol=1e-2, rtol=1e-2)

    print("KERNEL_OK")
</pallas_src>

<mosaic_0001>
module attributes {stable_mosaic.version = 11 : i64} {
  func.func @patch_embed_kernel(%arg0: i32, %arg1: i32, %arg2: memref<32x192xf32, #tpu.memory_space<vmem>>, %arg3: memref<192x128xf32, #tpu.memory_space<vmem>>, %arg4: memref<1x128xf32, #tpu.memory_space<vmem>>, %arg5: memref<32x128xf32, #tpu.memory_space<vmem>>) attributes {dimension_semantics = [#tpu.dimension_semantics<parallel>, #tpu.dimension_semantics<parallel>], iteration_bounds = array<i64: 1, 1>, scalar_prefetch = 0 : i64, scratch_operands = 0 : i64, tpu.core_type = #tpu.core_type<tc>, window_params = [{transform_indices = @transform_0, window_bounds = array<i64: 32, 192>}, {transform_indices = @transform_1, window_bounds = array<i64: 192, 128>}, {transform_indices = @transform_2, window_bounds = array<i64: 1, 128>}, {transform_indices = @transform_3, window_bounds = array<i64: 32, 128>}]} {
    %c0 = arith.constant 0 : index
    %c0_0 = arith.constant 0 : index
    %0 = vector.load %arg2[%c0, %c0_0] : memref<32x192xf32, #tpu.memory_space<vmem>>, vector<32x192xf32>
    %c0_1 = arith.constant 0 : index
    %c0_2 = arith.constant 0 : index
    %1 = vector.load %arg3[%c0_1, %c0_2] : memref<192x128xf32, #tpu.memory_space<vmem>>, vector<192x128xf32>
    %cst = arith.constant dense<0.000000e+00> : vector<32x128xf32>
    %2 = tpu.matmul %0, %1, %cst {dimension_numbers = #tpu.dot_dimension_numbers<[1], [0], [0], [1], [0, 0, 1, 1], [], []>} : vector<32x192xf32>, vector<192x128xf32>, vector<32x128xf32> -> vector<32x128xf32>
    %c0_3 = arith.constant 0 : index
    %c0_4 = arith.constant 0 : index
    %3 = vector.load %arg4[%c0_3, %c0_4] : memref<1x128xf32, #tpu.memory_space<vmem>>, vector<1x128xf32>
    %4 = vector.broadcast %3 : vector<1x128xf32> to vector<32x128xf32>
    %5 = arith.addf %2, %4 : vector<32x128xf32>
    %c0_5 = arith.constant 0 : index
    %c0_6 = arith.constant 0 : index
    %6 = vector.load %arg5[%c0_5, %c0_6] : memref<32x128xf32, #tpu.memory_space<vmem>>, vector<32x128xf32>
    tpu.vector_store %arg5[%c0_5, %c0_6], %5 {strides = array<i32>} : memref<32x128xf32, #tpu.memory_space<vmem>>, vector<32x128xf32>,
    return
  }
  func.func @transform_0(%arg0: i32, %arg1: i32) -> (i32, i32) {
    %c0_i32 = arith.constant 0 : i32
    %c0_i32_0 = arith.constant 0 : i32
    return %arg0, %c0_i32 : i32, i32
  }
  func.func @transform_1(%arg0: i32, %arg1: i32) -> (i32, i32) {
    %c0_i32 = arith.constant 0 : i32
    %c0_i32_0 = arith.constant 0 : i32
    return %c0_i32, %arg1 : i32, i32
  }
  func.func @transform_2(%arg0: i32, %arg1: i32) -> (i32, i32) {
    %c0_i32 = arith.constant 0 : i32
    %c0_i32_0 = arith.constant 0 : i32
    return %c0_i32, %arg1 : i32, i32
  }
  func.func @transform_3(%arg0: i32, %arg1: i32) -> (i32, i32) {
    %c0_i32 = arith.constant 0 : i32
    return %arg0, %arg1 : i32, i32
  }
}

</mosaic_0001>

<llo_original>
// kernel: tpu_custom_call.1
$region0: #{tpu_custom_call.1}
  #allocation0 [shape = 'u32[]', space=smem, size = 0x4, offset = 0x4, fixed_abs, tag = 'smem constant byte address 0x4 - core index']
  #allocation1 [shape = 'u32[144,128]{1,0:T(1,128)}', space=vmem, size = 0x12000, scoped, tag = 'internal scratch']
  %s0 = inlined_call_operand.hbm [shape: f32[32,192], index: 0, kind: input, shape index: {}]
  %s1 = inlined_call_operand.hbm [shape: f32[192,128], index: 1, kind: input, shape index: {}]
  %s2 = inlined_call_operand.vmem [shape: f32[1,128], index: 2, kind: input, shape index: {}]
  %s3 = inlined_call_operand.hbm [shape: f32[32,128], index: 3, kind: output, shape index: {}]
  %s4 = sld [smem:[#allocation0]]
  $region30: #{tpu_custom_call.1} parent=0
    _
  %s6 = ssub.s32 1, %s4
  %s7 = scalar_select 0, %s6, %s4
  $region1: #{tpu_custom_call.1} parent=0
    #allocation2 [shape = 'u8[32768]{0}', space=vmem, size = 0x8000, scoped, tag = 'input window, operand 0, single buffered']
    #allocation3 [shape = 's32[1]{0}', space=sflag, size = 0x4, scoped, tag = 'scoped memory for tpu_custom_call.1']
    #allocation4 [shape = 's32[1]{0}', space=sflag, size = 0x4, scoped, tag = 'scoped memory for tpu_custom_call.1']
    #allocation5 [shape = 'u8[98304]{0}', space=vmem, size = 0x18000, scoped, tag = 'input window, operand 1, single buffered']
    #allocation6 [shape = 's32[1]{0}', space=sflag, size = 0x4, scoped, tag = 'scoped memory for tpu_custom_call.1']
    #allocation7 [shape = 'u8[16384]{0}', space=vmem, size = 0x4000, scoped, tag = 'output window, operand 0, single buffered']
    %8 = vsyncpa [#allocation3], 0
    %9 = vsyncpa [#allocation6], 0
    %10 = vsyncpa [#allocation4], 0
    // Predicated region
    $region2: #{tpu_custom_call.1} parent=1 // pred_check
      _
    $region3: #{tpu_custom_call.1} parent=1 // pred_check_branch
      %12 = sbr.rel (0) target = $region5
    $region4: #{tpu_custom_call.1} parent=1 // pred_region
      %s14 = ssub.s32 1024, 1024
      %15 = vsyncadd [#allocation3], %s14
      %s16 = sshll.u32 [#allocation2], 4
      %s17 = int_to_ptr.vmem [resolvable:$true] %s16
      %22 = dma.hbm_to_vmem [thread:$0]  %s0, 1024, %s17, [#allocation3], 256, 256, 16
    $region5: #{tpu_custom_call.1} parent=1 // pred_fallthru
      _
    // Predicated region
    $region6: #{tpu_custom_call.1} parent=1 // pred_check
      _
    $region7: #{tpu_custom_call.1} parent=1 // pred_check_branch
      %24 = sbr.rel (0) target = $region9
    $region8: #{tpu_custom_call.1} parent=1 // pred_region
      %s26 = ssub.s32 3072, 3072
      %27 = vsyncadd [#allocation6], %s26
      %s28 = sshll.u32 [#allocation5], 4
      %s29 = int_to_ptr.vmem [resolvable:$true] %s28
      %34 = dma.hbm_to_vmem [thread:$0]  %s1, 3072, %s29, [#allocation6], 128, 128, 8
    $region9: #{tpu_custom_call.1} parent=1 // pred_fallthru
      _
    // Predicated region
    $region10: #{tpu_custom_call.1} parent=1 // pred_check
      _
    $region11: #{tpu_custom_call.1} parent=1 // pred_check_branch
      %36 = sbr.rel (0) target = $region13
    $region12: #{tpu_custom_call.1} parent=1 // pred_region
      _
    $region13: #{tpu_custom_call.1} parent=1 // pred_fallthru
      _
    // Predicated region
    $region14: #{tpu_custom_call.1} parent=1 // pred_check
      _
    $region15: #{tpu_custom_call.1} parent=1 // pred_check_branch
      %38 = sbr.rel (0) target = $region17
    $region16: #{tpu_custom_call.1} parent=1 // pred_region
      %39 = dma.done [#allocation3], 1024
    $region17: #{tpu_custom_call.1} parent=1 // pred_fallthru
      _
    // Predicated region
    $region18: #{tpu_custom_call.1} parent=1 // pred_check
      _
    $region19: #{tpu_custom_call.1} parent=1 // pred_check_branch
      %41 = sbr.rel (0) target = $region21
    $region20: #{tpu_custom_call.1} parent=1 // pred_region
      %42 = dma.done [#allocation6], 3072
    $region21: #{tpu_custom_call.1} parent=1 // pred_fallthru
      _
    %v43 = vld [vmem:[#allocation2] sm:$0xff]
    %v44 = vld [vmem:[#allocation2 + $0x8] sm:$0xff]
    %v45 = vld [vmem:[#allocation2 + $0x10] sm:$0xff]
    %v46 = vld [vmem:[#allocation2 + $0x18] sm:$0xff]
    %v47 = vld [vmem:[#allocation2 + $0x20] sm:$0xff]
    %v48 = vld [vmem:[#allocation2 + $0x28] sm:$0xff]
    %v49 = vld [vmem:[#allocation2 + $0x30] sm:$0xff]
    %v50 = vld [vmem:[#allocation2 + $0x38] sm:$0xff]
    %v51 = vld [vmem:[#allocation5] sm:$0xff]
    %v52 = vld [vmem:[#allocation5 + $0x8] sm:$0xff]
    %v53 = vld [vmem:[#allocation5 + $0x10] sm:$0xff]
    %v54 = vld [vmem:[#allocation5 + $0x18] sm:$0xff]
    %v55 = vld [vmem:[#allocation5 + $0x20] sm:$0xff]
    %v56 = vld [vmem:[#allocation5 + $0x28] sm:$0xff]
    %v57 = vld [vmem:[#allocation5 + $0x30] sm:$0xff]
    %v58 = vld [vmem:[#allocation5 + $0x38] sm:$0xff]
    %v59 = vld [vmem:[#allocation5 + $0x40] sm:$0xff]
    %v60 = vld [vmem:[#allocation5 + $0x48] sm:$0xff]
    %v61 = vld [vmem:[#allocation5 + $0x50] sm:$0xff]
    %v62 = vld [vmem:[#allocation5 + $0x58] sm:$0xff]
    %v63 = vld [vmem:[#allocation5 + $0x60] sm:$0xff]
    %v64 = vld [vmem:[#allocation5 + $0x68] sm:$0xff]
    %v65 = vld [vmem:[#allocation5 + $0x70] sm:$0xff]
    %v66 = vld [vmem:[#allocation5 + $0x78] sm:$0xff]
    %v67 = vld [vmem:[#allocation5 + $0x80] sm:$0xff]
    %v68 = vld [vmem:[#allocation5 + $0x88] sm:$0xff]
    %v69 = vld [vmem:[#allocation5 + $0x90] sm:$0xff]
    %v70 = vld [vmem:[#allocation5 + $0x98] sm:$0xff]
    %v71 = vld [vmem:[#allocation5 + $0xa0] sm:$0xff]
    %v72 = vld [vmem:[#allocation5 + $0xa8] sm:$0xff]
    %v73 = vld [vmem:[#allocation5 + $0xb0] sm:$0xff]
    %v74 = vld [vmem:[#allocation5 + $0xb8] sm:$0xff]
    %v75 = vld [vmem:[%s2] sm:$0x1]
    %v77 = vlaneseq
    %v78 = vshrl.u32 %v77, 7
    %v79 = vsub.s32 0, %v78
    %v80 = vrot.slane %v75, %v79
    %vm82 = vcmask 523264
    %v84 = vsel %vm82, %v44, 0
    %v87 = vsel %vm82, %v46, 0
    %v90 = vsel %vm82, %v48, 0
    %v93 = vsel %vm82, %v50, 0
    %95 = vmatprep.subr.mxu0 0.0
    %96 = vmatpush1.msra.mxu0 %v51
    %97 = vmatprep.subr.mxu0 0.0
    %98 = vmatpush1.msra.mxu0 %v52
    %99 = vmatprep.subr.mxu0 0.0
    %100 = vmatpush1.msra.mxu0 %v53
    %101 = vmatprep.subr.mxu0 0.0
    %102 = vmatpush1.msra.mxu0 %v54
    %103 = vmatprep.subr.mxu0 0.0
    %104 = vmatpush1.msra.mxu0 %v55
    %105 = vmatprep.subr.mxu0 0.0
    %106 = vmatpush1.msra.mxu0 %v56
    %107 = vmatprep.subr.mxu0 0.0
    %108 = vmatpush1.msra.mxu0 %v57
    %109 = vmatprep.subr.mxu0 0.0
    %110 = vmatpush1.msra.mxu0 %v58
    %111 = vmatprep.subr.mxu0 0.0
    %112 = vmatpush1.msra.mxu0 %v59
    %113 = vmatprep.subr.mxu0 0.0
    %114 = vmatpush1.msra.mxu0 %v60
    %115 = vmatprep.subr.mxu0 0.0
    %116 = vmatpush1.msra.mxu0 %v61
    %117 = vmatprep.subr.mxu0 0.0
    %118 = vmatpush1.msra.mxu0 %v62
    %119 = vmatprep.subr.mxu0 0.0
    %120 = vmatpush1.msra.mxu0 %v63
    %121 = vmatprep.subr.mxu0 0.0
    %122 = vmatpush1.msra.mxu0 %v64
    %123 = vmatprep.subr.mxu0 0.0
    %124 = vmatpush1.msra.mxu0 %v65
    %125 = vmatprep.subr.mxu0 0.0
    %126 = vmatpush1.msra.mxu0 %v66
    %127 = vmatprep.subr.mxu0 0.0
    %128 = vmatpush1.msra.mxu0 %v67
    %129 = vmatprep.subr.mxu0 0.0
    %130 = vmatpush1.msra.mxu0 %v68
    %131 = vmatprep.subr.mxu0 0.0
    %132 = vmatpush1.msra.mxu0 %v69
    %133 = vmatprep.subr.mxu0 0.0
    %134 = vmatpush1.msra.mxu0 %v70
    %135 = vmatprep.subr.mxu0 0.0
    %136 = vmatpush1.msra.mxu0 %v71
    %137 = vmatprep.subr.mxu0 0.0
    %138 = vmatpush1.msra.mxu0 %v72
    %139 = vmatprep.subr.mxu0 0.0
    %140 = vmatpush1.msra.mxu0 %v73
    %141 = vmatprep.subr.mxu0 0.0
    %142 = vmatpush1.msra.mxu0 %v74
    %143 = vmatprep.subr.mxu0 0.0
    %144 = vmatpush1.msra.mxu0 0.0
    %145 = vmatprep.subr.mxu0 0.0
    %146 = vmatpush1.msra.mxu0 0.0
    %147 = vmatprep.subr.mxu0 0.0
    %148 = vmatpush1.msra.mxu0 0.0
    %149 = vmatprep.subr.mxu0 0.0
    %150 = vmatpush1.msra.mxu0 0.0
    %151 = vmatprep.subr.mxu0 0.0
    %152 = vmatpush1.msra.mxu0 0.0
    %153 = vmatprep.subr.mxu0 0.0
    %154 = vmatpush1.msra.mxu0 0.0
    %155 = vmatprep.subr.mxu0 0.0
    %156 = vmatpush1.msra.mxu0 0.0
    %157 = vmatprep.subr.mxu0 0.0
    %158 = vmatpush1.msra.mxu0 0.0
    %159 = vmatprep.mubr.f32.mxu0 %v84
    %160 = vmatmul.mubr.f32.gmra.mrb[0].mxu0 %v43
    %v161 = vpop.f32.mrb[0].mxu0
    %v162 = vadd.f32 %v80, %v161
    %v163 = vpop.f32.mrb[0].mxu0
    %164 = vmatprep.mubr.f32.mxu0 %v87
    %165 = vmatmul.mubr.f32.gmra.mrb[0].mxu0 %v45
    %v166 = vpop.f32.mrb[0].mxu0
    %v167 = vadd.f32 %v80, %v166
    %v168 = vpop.f32.mrb[0].mxu0
    %169 = vmatprep.mubr.f32.mxu0 %v90
    %170 = vmatmul.mubr.f32.gmra.mrb[0].mxu0 %v47
    %v171 = vpop.f32.mrb[0].mxu0
    %v172 = vadd.f32 %v80, %v171
    %v173 = vpop.f32.mrb[0].mxu0
    %174 = vmatprep.mubr.f32.mxu0 %v93
    %175 = vmatmul.mubr.f32.gmra.mrb[0].mxu0 %v49
    %v176 = vpop.f32.mrb[0].mxu0
    %v177 = vadd.f32 %v80, %v176
    %v178 = vpop.f32.mrb[0].mxu0
    %179 = vdwg.mxu0
    %180 = vst [vmem:[#allocation7] sm:$0xff] %v162
    %181 = vst [vmem:[#allocation7 + $0x8] sm:$0xff] %v167
    %182 = vst [vmem:[#allocation7 + $0x10] sm:$0xff] %v172
    %183 = vst [vmem:[#allocation7 + $0x18] sm:$0xff] %v177
    // Predicated region
    $region22: #{tpu_custom_call.1} parent=1 // pred_check
      _
    $region23: #{tpu_custom_call.1} parent=1 // pred_check_branch
      %185 = sbr.rel (0) target = $region25
    $region24: #{tpu_custom_call.1} parent=1 // pred_region
      %s187 = ssub.s32 512, 512
      %188 = vsyncadd [#allocation4], %s187
      %s189 = sshll.u32 [#allocation7], 4
      %s190 = int_to_ptr.vmem [resolvable:$true] %s189
      %195 = dma.vmem_to_hbm [thread:$0]  %s190, 512, %s3, [#allocation4], 128, 128, 8
    $region25: #{tpu_custom_call.1} parent=1 // pred_fallthru
      _
    // Predicated region
    $region26: #{tpu_custom_call.1} parent=1 // pred_check
      _
    $region27: #{tpu_custom_call.1} parent=1 // pred_check_branch
      %197 = sbr.rel (0) target = $region29
    $region28: #{tpu_custom_call.1} parent=1 // pred_region
      %198 = dma.done [#allocation4], 512
    $region29: #{tpu_custom_call.1} parent=1 // pred_fallthru
      _
    %199 = vsyncpa [#allocation3], 1
    %200 = vsyncpa [#allocation6], 1
    %201 = vsyncpa [#allocation4], 1

</llo_original>
